<compile_context>
chip_gen: v7x
topology: tpu7x:2x2x1
jax: 0.10.0
libtpu: 0.0.40
codegen_flags: <defaults>
</compile_context>

<pallas_src>
import jax
import jax.numpy as jnp
from jax.experimental import pallas as pl
from jax.experimental.pallas import tpu as pltpu


_LANES = 128
_PALLAS_MIN_ELEMS = 1 << 20   # ~4 MiB f32; below this, XLA's fused add wins


def _add_two_kernel(x_ref, o_ref):
    # Elementwise hot path: y = x + 2 (constant cast to the input dtype).
    o_ref[...] = x_ref[...] + jnp.asarray(2, dtype=x_ref.dtype)


def _block_config():
    """Per-generation block-byte target and optional scoped-VMEM override."""
    try:
        kind = jax.devices()[0].device_kind.lower()
    except Exception:
        kind = ""
    if "v7" in kind:
        # v7x: 3.2 TB/s HBM -> use 8 MiB blocks to amortize per-step overhead;
        # 2 bufs x (in + out) x 8 MiB = 32 MiB, so raise the scoped VMEM limit
        # (48 MiB < 64 MiB physical).
        return 8 << 20, 48 << 20
    # v5e / v6e: 2 MiB blocks are ~85% of HBM roofline and the double-buffered
    # footprint (8 MiB) fits the default scoped-VMEM limit. No override.
    return 2 << 20, None


def _choose_tile_rows(rows, itemsize, target_bytes):
    # Packing-safe row granularity: (8,128) f32, (16,128) bf16, (32,128) int8.
    sub = max(8, 32 // itemsize)
    target_rows = max(sub, target_bytes // (_LANES * itemsize))
    # Cap so mid-size inputs still get >= 2 grid steps (dual-TC sharding on v7x).
    half_rows = pl.cdiv(pl.cdiv(rows, 2), sub) * sub
    tile_rows = min(target_rows, half_rows)
    if tile_rows >= rows:
        return rows                        # single full-extent block (always legal)
    return tile_rows


def _add_two_pallas_2d(x2d: jax.Array) -> jax.Array:
    """Tiled elementwise add on a lane-dense (rows, 128) slab. No extra copies."""
    rows, lanes = x2d.shape
    itemsize = jnp.dtype(x2d.dtype).itemsize
    target_bytes, vmem_limit = _block_config()
    tile_rows = _choose_tile_rows(rows, itemsize, target_bytes)
    n_tiles = pl.cdiv(rows, tile_rows)     # ragged last block is masked by Pallas

    cp_kwargs = dict(dimension_semantics=("parallel",))
    if vmem_limit is not None:
        cp_kwargs["vmem_limit_bytes"] = vmem_limit

    return pl.pallas_call(
        _add_two_kernel,
        out_shape=jax.ShapeDtypeStruct(x2d.shape, x2d.dtype),
        grid=(n_tiles,),
        in_specs=[pl.BlockSpec((tile_rows, lanes), lambda i: (i, 0))],
        out_specs=pl.BlockSpec((tile_rows, lanes), lambda i: (i, 0)),
        compiler_params=pltpu.CompilerParams(**cp_kwargs),
        cost_estimate=pl.CostEstimate(
            flops=rows * lanes,
            transcendentals=0,
            bytes_accessed=2 * rows * lanes * itemsize),
    )(x2d)


def add_two(x: jax.Array, *, force_pallas: bool = False) -> jax.Array:
    """TestModule.forward: y = x + 2, for any shape/dtype."""
    n = x.size
    two = jnp.asarray(2, dtype=x.dtype)
    if n == 0:
        return x + two
    lane_aligned = (n % _LANES) == 0

    if force_pallas:
        if lane_aligned:
            return _add_two_pallas_2d(x.reshape(-1, _LANES)).reshape(x.shape)
        # Demo/test path only: round the ragged tail up to the next 128-lane row.
        flat = x.reshape(-1)
        pad = (-n) % _LANES
        out = _add_two_pallas_2d(jnp.pad(flat, (0, pad)).reshape(-1, _LANES))
        return out.reshape(-1)[:n].reshape(x.shape)

    if lane_aligned and n >= _PALLAS_MIN_ELEMS:
        # Zero-copy reshape to a lane-dense slab; no pad, no slice, no aliasing.
        return _add_two_pallas_2d(x.reshape(-1, _LANES)).reshape(x.shape)

    # Small or lane-ragged inputs: a lone elementwise add is HBM-bound; XLA's
    # fused add already hits roofline and can fuse with neighbouring ops.
    return x + two


def init_params(key):
    """Deterministically initialize the (unused) fc1 = nn.Linear(5, 3) params."""
    k_w, k_b = jax.random.split(key)
    bound = 1.0 / jnp.sqrt(5.0)  # PyTorch default uniform(-1/sqrt(in), 1/sqrt(in))
    w = jax.random.uniform(k_w, (3, 5), jnp.float32, -bound, bound)
    b = jax.random.uniform(k_b, (3,), jnp.float32, -bound, bound)
    return {"fc1_weight": w, "fc1_bias": b}  # present for parity; not used


if __name__ == "__main__":
    key = jax.random.PRNGKey(0)
    k_param, k0, k1, k2, k3 = jax.random.split(key, 5)

    params = init_params(k_param)  # fc1 exists but forward never touches it

    # 1) Module-native small shape (batch=2, features=5): XLA-fused fallback path.
    x_small = jax.random.normal(k0, (2, 5), dtype=jnp.float32)
    y_small = jax.block_until_ready(add_two(x_small))
    assert y_small.shape == x_small.shape and y_small.dtype == x_small.dtype
    assert jnp.allclose(y_small, x_small + 2), "small (fallback) path mismatch"

    # 2) Same tiny ragged shape forced through the Pallas kernel (pad one row).
    y_small_pk = jax.block_until_ready(add_two(x_small, force_pallas=True))
    assert jnp.allclose(y_small_pk, x_small + 2), "small (pallas, ragged) mismatch"

    # 3) Lane-aligned small shape (8x16 = 128 elems): single full-extent block.
    x_row = jax.random.normal(k1, (8, 16), dtype=jnp.float32)
    y_row = jax.block_until_ready(add_two(x_row, force_pallas=True))
    assert jnp.allclose(y_row, x_row + 2), "single-row pallas path mismatch"

    # 4) Mid-size lane-aligned input: zero-copy reshape, >=2 grid steps.
    x_mid = jax.random.normal(k2, (256, 640), dtype=jnp.float32)  # 163,840 elems
    y_mid = jax.block_until_ready(add_two(x_mid, force_pallas=True))
    assert y_mid.shape == x_mid.shape and y_mid.dtype == x_mid.dtype
    assert jnp.allclose(y_mid, x_mid + 2), "mid (pallas) path mismatch"

    # 5) bf16 input exercises the dtype-aware tile-row selection.
    x_bf16 = jax.random.normal(k3, (64, 256), dtype=jnp.float32).astype(jnp.bfloat16)
    y_bf16 = jax.block_until_ready(add_two(x_bf16, force_pallas=True))
    assert y_bf16.dtype == jnp.bfloat16
    assert jnp.allclose(y_bf16.astype(jnp.float32),
                        (x_bf16 + 2).astype(jnp.float32)), "bf16 pallas path mismatch"

    print("KERNEL_OK")
</pallas_src>

<mosaic_0001>
module attributes {stable_mosaic.version = 11 : i64} {
  func.func @_add_two_kernel(%arg0: i32, %arg1: memref<1x128xf32, #tpu.memory_space<vmem>>, %arg2: memref<1x128xf32, #tpu.memory_space<vmem>>) attributes {dimension_semantics = [#tpu.dimension_semantics<parallel>], iteration_bounds = array<i64: 1>, scalar_prefetch = 0 : i64, scratch_operands = 0 : i64, tpu.core_type = #tpu.core_type<tc>, window_params = [{transform_indices = @transform_0, window_bounds = array<i64: 1, 128>}, {transform_indices = @transform_1, window_bounds = array<i64: 1, 128>}]} {
    %c0 = arith.constant 0 : index
    %c0_0 = arith.constant 0 : index
    %0 = vector.load %arg1[%c0, %c0_0] : memref<1x128xf32, #tpu.memory_space<vmem>>, vector<1x128xf32>
    %cst = arith.constant 2.000000e+00 : f32
    %1 = vector.broadcast %cst : f32 to vector<1x128xf32>
    %2 = arith.addf %0, %1 : vector<1x128xf32>
    %c0_1 = arith.constant 0 : index
    %c0_2 = arith.constant 0 : index
    %3 = vector.load %arg2[%c0_1, %c0_2] : memref<1x128xf32, #tpu.memory_space<vmem>>, vector<1x128xf32>
    tpu.vector_store %arg2[%c0_1, %c0_2], %2 {strides = array<i32>} : memref<1x128xf32, #tpu.memory_space<vmem>>, vector<1x128xf32>,
    return
  }
  func.func @transform_0(%arg0: i32) -> (i32, i32) {
    %c0_i32 = arith.constant 0 : i32
    %c0_i32_0 = arith.constant 0 : i32
    return %arg0, %c0_i32 : i32, i32
  }
  func.func @transform_1(%arg0: i32) -> (i32, i32) {
    %c0_i32 = arith.constant 0 : i32
    %c0_i32_0 = arith.constant 0 : i32
    return %arg0, %c0_i32 : i32, i32
  }
}

</mosaic_0001>

<llo_original>
// kernel: tpu_custom_call.1
$region0: #{tpu_custom_call.1}
  #allocation0 [shape = 'u32[]', space=smem, size = 0x4, offset = 0x4, fixed_abs, tag = 'smem constant byte address 0x4 - core index']
  #allocation1 [shape = 'u32[144,128]{1,0:T(1,128)}', space=vmem, size = 0x12000, scoped, tag = 'internal scratch']
  %s0 = inlined_call_operand.hbm [shape: f32[1,128], index: 0, kind: input, shape index: {}]
  %s1 = inlined_call_operand.hbm [shape: f32[1,128], index: 1, kind: output, shape index: {}]
  %s2 = sld [smem:[#allocation0]]
  $region18: #{tpu_custom_call.1} parent=0
    _
  %s4 = ssub.s32 1, %s2
  %s5 = scalar_select 0, %s4, %s2
  $region1: #{tpu_custom_call.1} parent=0
    #allocation2 [shape = 'u8[512]{0}', space=vmem, size = 0x400, scoped, tag = 'input window, operand 0, single buffered']
    #allocation3 [shape = 's32[1]{0}', space=sflag, size = 0x4, scoped, tag = 'scoped memory for tpu_custom_call.1']
    #allocation4 [shape = 's32[1]{0}', space=sflag, size = 0x4, scoped, tag = 'scoped memory for tpu_custom_call.1']
    #allocation5 [shape = 'u8[512]{0}', space=vmem, size = 0x400, scoped, tag = 'output window, operand 0, single buffered']
    %6 = vsyncpa [#allocation3], 0
    %7 = vsyncpa [#allocation4], 0
    // Predicated region
    $region2: #{tpu_custom_call.1} parent=1 // pred_check
      _
    $region3: #{tpu_custom_call.1} parent=1 // pred_check_branch
      %9 = sbr.rel (0) target = $region5
    $region4: #{tpu_custom_call.1} parent=1 // pred_region
      %s11 = ssub.s32 16, 16
      %12 = vsyncadd [#allocation3], %s11
      %s14 = sshll.u32 [#allocation2], 4
      %s15 = int_to_ptr.vmem [resolvable:$true] %s14
      %17 = dma.hbm_to_vmem [thread:$0]  %s0, 16, %s15, [#allocation3]
    $region5: #{tpu_custom_call.1} parent=1 // pred_fallthru
      _
    // Predicated region
    $region6: #{tpu_custom_call.1} parent=1 // pred_check
      _
    $region7: #{tpu_custom_call.1} parent=1 // pred_check_branch
      %19 = sbr.rel (0) target = $region9
    $region8: #{tpu_custom_call.1} parent=1 // pred_region
      %20 = dma.done [#allocation3], 16
    $region9: #{tpu_custom_call.1} parent=1 // pred_fallthru
      _
    %v21 = vld [vmem:[#allocation2] sm:$0x1]
    %v22 = vadd.f32 %v21, 2.0
    %23 = vst [vmem:[#allocation5] sm:$0x1] %v22
    // Predicated region
    $region10: #{tpu_custom_call.1} parent=1 // pred_check
      _
    $region11: #{tpu_custom_call.1} parent=1 // pred_check_branch
      %25 = sbr.rel (0) target = $region13
    $region12: #{tpu_custom_call.1} parent=1 // pred_region
      %s27 = ssub.s32 16, 16
      %28 = vsyncadd [#allocation4], %s27
      %s30 = sshll.u32 [#allocation5], 4
      %s31 = int_to_ptr.vmem [resolvable:$true] %s30
      %33 = dma.vmem_to_hbm [thread:$0]  %s31, 16, %s1, [#allocation4]
    $region13: #{tpu_custom_call.1} parent=1 // pred_fallthru
      _
    // Predicated region
    $region14: #{tpu_custom_call.1} parent=1 // pred_check
      _
    $region15: #{tpu_custom_call.1} parent=1 // pred_check_branch
      %35 = sbr.rel (0) target = $region17
    $region16: #{tpu_custom_call.1} parent=1 // pred_region
      %36 = dma.done [#allocation4], 16
    $region17: #{tpu_custom_call.1} parent=1 // pred_fallthru
      _
    %37 = vsyncpa [#allocation3], 1
    %38 = vsyncpa [#allocation4], 1

</llo_original>
